<compile_context>
chip_gen: v5e
topology: v5e:2x2
jax: 0.10.0
libtpu: 0.0.40
codegen_flags: <defaults>
</compile_context>

<pallas_src>
import functools

import jax
import jax.numpy as jnp
from jax.experimental import pallas as pl
from jax.experimental.pallas import tpu as pltpu

HIDDEN = 512
LANE = 128


def _round_up(x, m):
    return ((x + m - 1) // m) * m


def _resident_spec(shape):
    """BlockSpec for a VMEM-resident operand (constant index_map).

    Single-buffered when the installed JAX supports BlockSpec(pipeline_mode=...);
    falls back to the default (double-buffered) spec otherwise.
    """
    index_map = lambda i: (0, 0)
    if hasattr(pl, "Buffered"):
        try:
            return pl.BlockSpec(shape, index_map, pipeline_mode=pl.Buffered(1))
        except TypeError:
            pass
    return pl.BlockSpec(shape, index_map)


def _choose_tm(batch, k, n_pad, x_bytes):
    """Pick the batch-tile row count and return (tm, vmem_bytes_needed).

    * >= 2 grid steps whenever batch > 8 so the "parallel" axis shards across
      both v7x TensorCores.
    * Capped at 512 rows (measured ~85% of HBM roofline on v6e; bigger tiles
      give <2% more).
    * Capped by a VMEM budget conservative enough for v7x (64 MiB physical),
      counting weights as double-buffered in case single-buffering is ignored.
    """
    if batch <= 8:
        tm = 8
    else:
        tm = min(512, _round_up(pl.cdiv(batch, 2), 8))

    weight_bytes = 2 * (k * HIDDEN * 2 + HIDDEN * n_pad * 2) + (HIDDEN + n_pad) * 4

    def need(t):
        return (2 * t * k * x_bytes          # double-buffered x tile
                + weight_bytes               # resident weights (worst case 2x)
                + 2 * t * n_pad * 4          # double-buffered logits tile
                + 2 * t * 2 * 4)             # labels + per-example loss tiles

    budget = 40 << 20
    while tm > 8 and need(tm) > budget:
        tm -= 8
    return tm, need(tm)


def _vmem_limit(need_bytes):
    # Explicit scoped-VMEM limit: actual footprint + headroom, capped at 64 MiB
    # (v7x physical), floored at 32 MiB (>= the default on every generation).
    return max(32 << 20, min(int(need_bytes * 1.4) + (4 << 20), 64 << 20))


def _forward_core(x_ref, w1_ref, b1_ref, w2_ref, b2_ref):
    # MXU: bf16 operands, f32 accumulation. Bias add / ReLU stay f32 on the VPU.
    x = x_ref[...].astype(jnp.bfloat16)
    h = jnp.dot(x, w1_ref[...], preferred_element_type=jnp.float32) + b1_ref[...]
    h = jnp.maximum(h, 0.0)  # ReLU
    # Dropout(p=0.1) -> identity at inference time.
    logits = jnp.dot(h.astype(jnp.bfloat16), w2_ref[...],
                     preferred_element_type=jnp.float32) + b2_ref[...]
    return logits


def _mlp_kernel(x_ref, w1_ref, b1_ref, w2_ref, b2_ref, logits_ref):
    logits_ref[...] = _forward_core(x_ref, w1_ref, b1_ref, w2_ref, b2_ref)


def _mlp_loss_kernel(x_ref, labels_ref, w1_ref, b1_ref, w2_ref, b2_ref,
                     logits_ref, loss_ref, *, num_labels):
    logits = _forward_core(x_ref, w1_ref, b1_ref, w2_ref, b2_ref)
    logits_ref[...] = logits

    # Fused cross-entropy epilogue (per-example NLL); padded label lanes masked out.
    tm, n_pad = logits.shape
    col = jax.lax.broadcasted_iota(jnp.int32, (tm, n_pad), 1)
    masked = jnp.where(col < num_labels, logits, -jnp.inf)
    m = jnp.max(masked, axis=-1, keepdims=True)
    lse = m + jnp.log(jnp.sum(jnp.exp(masked - m), axis=-1, keepdims=True))
    onehot = (col == labels_ref[...]).astype(jnp.float32)  # labels_ref: [TM, 1] int32
    picked = jnp.sum(logits * onehot, axis=-1, keepdims=True)
    loss_ref[...] = lse - picked


@jax.jit
def _forward_logits(features, w1, b1, w2, b2):
    B, K = features.shape
    N_pad = w2.shape[1]
    TM, need = _choose_tm(B, K, N_pad, features.dtype.itemsize)

    logits_pad = pl.pallas_call(
        _mlp_kernel,
        out_shape=jax.ShapeDtypeStruct((B, N_pad), jnp.float32),
        grid=(pl.cdiv(B, TM),),
        in_specs=[pl.BlockSpec((TM, K), lambda i: (i, 0)),
                  _resident_spec((K, HIDDEN)),
                  _resident_spec((1, HIDDEN)),
                  _resident_spec((HIDDEN, N_pad)),
                  _resident_spec((1, N_pad))],
        out_specs=pl.BlockSpec((TM, N_pad), lambda i: (i, 0)),
        compiler_params=pltpu.CompilerParams(
            dimension_semantics=("parallel",),
            vmem_limit_bytes=_vmem_limit(need)),
        cost_estimate=pl.CostEstimate(
            flops=2 * B * (K * HIDDEN + HIDDEN * N_pad),
            transcendentals=0,
            bytes_accessed=(features.size * features.dtype.itemsize
                            + w1.size * 2 + w2.size * 2
                            + (b1.size + b2.size) * 4 + B * N_pad * 4)),
    )(features, w1, b1, w2, b2)
    return logits_pad


@functools.partial(jax.jit, static_argnames=("num_labels",))
def _forward_with_loss(features, labels, w1, b1, w2, b2, *, num_labels):
    B, K = features.shape
    N_pad = w2.shape[1]
    TM, need = _choose_tm(B, K, N_pad, features.dtype.itemsize)
    lab = labels.astype(jnp.int32).reshape(B, 1)

    logits_pad, per_ex = pl.pallas_call(
        functools.partial(_mlp_loss_kernel, num_labels=num_labels),
        out_shape=(jax.ShapeDtypeStruct((B, N_pad), jnp.float32),
                   jax.ShapeDtypeStruct((B, 1), jnp.float32)),
        grid=(pl.cdiv(B, TM),),
        in_specs=[pl.BlockSpec((TM, K), lambda i: (i, 0)),
                  pl.BlockSpec((TM, 1), lambda i: (i, 0)),
                  _resident_spec((K, HIDDEN)),
                  _resident_spec((1, HIDDEN)),
                  _resident_spec((HIDDEN, N_pad)),
                  _resident_spec((1, N_pad))],
        out_specs=(pl.BlockSpec((TM, N_pad), lambda i: (i, 0)),
                   pl.BlockSpec((TM, 1), lambda i: (i, 0))),
        compiler_params=pltpu.CompilerParams(
            dimension_semantics=("parallel",),
            vmem_limit_bytes=_vmem_limit(need)),
        cost_estimate=pl.CostEstimate(
            flops=2 * B * (K * HIDDEN + HIDDEN * N_pad),
            transcendentals=B * N_pad,
            bytes_accessed=(features.size * features.dtype.itemsize + lab.size * 4
                            + w1.size * 2 + w2.size * 2 + (b1.size + b2.size) * 4
                            + B * N_pad * 4 + B * 4)),
    )(features, lab, w1, b1, w2, b2)

    loss = jnp.sum(per_ex[:, 0]) / B  # CrossEntropyLoss mean reduction
    return logits_pad, loss


class ProjectedFeatureClassifier:
    """JAX/Pallas port of the PyTorch ProjectedFeatureClassifier."""

    def __init__(self, input_dim, num_labels, key):
        k1, k2, k3, k4 = jax.random.split(key, 4)
        # Deterministic init mimicking nn.Linear default (uniform in +-1/sqrt(fan_in)).
        bound1 = 1.0 / (input_dim ** 0.5)
        bound2 = 1.0 / (HIDDEN ** 0.5)
        N_pad = _round_up(num_labels, LANE)
        w1 = jax.random.uniform(k1, (input_dim, HIDDEN), jnp.float32, -bound1, bound1)
        b1 = jax.random.uniform(k2, (1, HIDDEN), jnp.float32, -bound1, bound1)
        w2 = jax.random.uniform(k3, (HIDDEN, num_labels), jnp.float32, -bound2, bound2)
        b2 = jax.random.uniform(k4, (1, num_labels), jnp.float32, -bound2, bound2)
        # w1 stays UNPADDED in K (no wrapper-side x pad / extra HBM pass).
        # Only num_labels is lane-padded so the logits store is lane-dense (unmasked vst).
        self.w1 = w1.astype(jnp.bfloat16)
        self.b1 = b1
        self.w2 = jnp.pad(w2, ((0, 0), (0, N_pad - num_labels))).astype(jnp.bfloat16)
        self.b2 = jnp.pad(b2, ((0, 0), (0, N_pad - num_labels)))
        self.input_dim = input_dim
        self.num_labels = num_labels

    def __call__(self, features, labels=None):
        if labels is None:
            logits_pad = _forward_logits(features, self.w1, self.b1, self.w2, self.b2)
            return logits_pad[:, :self.num_labels], None
        logits_pad, loss = _forward_with_loss(
            features, labels, self.w1, self.b1, self.w2, self.b2,
            num_labels=self.num_labels)
        return logits_pad[:, :self.num_labels], loss


def _reference(features, model, labels):
    # Same math as the kernel (bf16-rounded matmul operands, f32 accumulation).
    xb = features.astype(jnp.bfloat16).astype(jnp.float32)
    h = jnp.maximum(xb @ model.w1.astype(jnp.float32) + model.b1, 0.0)
    hb = h.astype(jnp.bfloat16).astype(jnp.float32)
    logits = (hb @ model.w2.astype(jnp.float32) + model.b2)[:, :model.num_labels]
    lse = jax.scipy.special.logsumexp(logits, axis=-1)
    picked = jnp.take_along_axis(logits, labels[:, None], axis=-1)[:, 0]
    loss = jnp.mean(lse - picked)
    return logits, loss


if __name__ == "__main__":
    key = jax.random.PRNGKey(0)
    k_param, k_feat, k_lab = jax.random.split(key, 3)

    # B=10 deliberately exercises a multi-step grid (2 tiles of 8 rows) with a
    # ragged last tile -> masked edge-block stores, and v7x two-core sharding.
    B, input_dim, num_labels = 10, 32, 4
    features = jax.random.normal(k_feat, (B, input_dim), jnp.float32)
    labels = jax.random.randint(k_lab, (B,), 0, num_labels)

    model = ProjectedFeatureClassifier(input_dim, num_labels, k_param)

    # Fused forward + CE loss path.
    logits, loss = model(features, labels)
    logits = jax.block_until_ready(logits)
    loss = jax.block_until_ready(loss)

    # Logits-only path (labels=None).
    logits_nl, no_loss = model(features)
    logits_nl = jax.block_until_ready(logits_nl)

    ref_logits, ref_loss = _reference(features, model, labels)
    assert logits.shape == (B, num_labels), "bad logits shape"
    assert no_loss is None, "labels=None must return loss=None"
    assert jnp.allclose(logits, ref_logits, atol=2e-3, rtol=2e-3), "logits mismatch"
    assert jnp.allclose(logits_nl, ref_logits, atol=2e-3, rtol=2e-3), "logits (no-loss path) mismatch"
    assert jnp.allclose(loss, ref_loss, atol=2e-3, rtol=2e-3), "loss mismatch"

    print("KERNEL_OK")
</pallas_src>

<mosaic_0001>
module attributes {stable_mosaic.version = 11 : i64} {
  func.func @_mlp_loss_kernel(%arg0: i32, %arg1: memref<8x32xf32, #tpu.memory_space<vmem>>, %arg2: memref<8x1xi32, #tpu.memory_space<vmem>>, %arg3: memref<32x512xbf16, #tpu.memory_space<vmem>>, %arg4: memref<1x512xf32, #tpu.memory_space<vmem>>, %arg5: memref<512x128xbf16, #tpu.memory_space<vmem>>, %arg6: memref<1x128xf32, #tpu.memory_space<vmem>>, %arg7: memref<8x128xf32, #tpu.memory_space<vmem>>, %arg8: memref<8x1xf32, #tpu.memory_space<vmem>>) attributes {dimension_semantics = [#tpu.dimension_semantics<parallel>], iteration_bounds = array<i64: 2>, scalar_prefetch = 0 : i64, scratch_operands = 0 : i64, tpu.core_type = #tpu.core_type<tc>, window_params = [{transform_indices = @transform_0, window_bounds = array<i64: 8, 32>}, {transform_indices = @transform_1, window_bounds = array<i64: 8, 1>}, {pipeline_mode = #tpu.pipeline_mode<synchronous>, transform_indices = @transform_2, window_bounds = array<i64: 32, 512>}, {pipeline_mode = #tpu.pipeline_mode<synchronous>, transform_indices = @transform_3, window_bounds = array<i64: 1, 512>}, {pipeline_mode = #tpu.pipeline_mode<synchronous>, transform_indices = @transform_4, window_bounds = array<i64: 512, 128>}, {pipeline_mode = #tpu.pipeline_mode<synchronous>, transform_indices = @transform_5, window_bounds = array<i64: 1, 128>}, {transform_indices = @transform_6, window_bounds = array<i64: 8, 128>}, {transform_indices = @transform_7, window_bounds = array<i64: 8, 1>}]} {
    %c0 = arith.constant 0 : index
    %c0_0 = arith.constant 0 : index
    %0 = vector.load %arg1[%c0, %c0_0] : memref<8x32xf32, #tpu.memory_space<vmem>>, vector<8x32xf32>
    %1 = arith.truncf %0 : vector<8x32xf32> to vector<8x32xbf16>
    %c0_1 = arith.constant 0 : index
    %c0_2 = arith.constant 0 : index
    %2 = vector.load %arg3[%c0_1, %c0_2] : memref<32x512xbf16, #tpu.memory_space<vmem>>, vector<32x512xbf16>
    %cst = arith.constant dense<0.000000e+00> : vector<8x512xf32>
    %3 = tpu.matmul %1, %2, %cst {dimension_numbers = #tpu.dot_dimension_numbers<[1], [0], [0], [1], [0, 0, 1, 1], [], []>} : vector<8x32xbf16>, vector<32x512xbf16>, vector<8x512xf32> -> vector<8x512xf32>
    %c0_3 = arith.constant 0 : index
    %c0_4 = arith.constant 0 : index
    %4 = vector.load %arg4[%c0_3, %c0_4] : memref<1x512xf32, #tpu.memory_space<vmem>>, vector<1x512xf32>
    %5 = vector.broadcast %4 : vector<1x512xf32> to vector<8x512xf32>
    %6 = arith.addf %3, %5 : vector<8x512xf32>
    %cst_5 = arith.constant 0.000000e+00 : f32
    %7 = vector.broadcast %cst_5 : f32 to vector<8x512xf32>
    %8 = arith.maximumf %6, %7 : vector<8x512xf32>
    %9 = arith.truncf %8 : vector<8x512xf32> to vector<8x512xbf16>
    %c0_6 = arith.constant 0 : index
    %c0_7 = arith.constant 0 : index
    %10 = vector.load %arg5[%c0_6, %c0_7] : memref<512x128xbf16, #tpu.memory_space<vmem>>, vector<512x128xbf16>
    %cst_8 = arith.constant dense<0.000000e+00> : vector<8x128xf32>
    %11 = tpu.matmul %9, %10, %cst_8 {dimension_numbers = #tpu.dot_dimension_numbers<[1], [0], [0], [1], [0, 0, 1, 1], [], []>} : vector<8x512xbf16>, vector<512x128xbf16>, vector<8x128xf32> -> vector<8x128xf32>
    %c0_9 = arith.constant 0 : index
    %c0_10 = arith.constant 0 : index
    %12 = vector.load %arg6[%c0_9, %c0_10] : memref<1x128xf32, #tpu.memory_space<vmem>>, vector<1x128xf32>
    %13 = vector.broadcast %12 : vector<1x128xf32> to vector<8x128xf32>
    %14 = arith.addf %11, %13 : vector<8x128xf32>
    %c0_11 = arith.constant 0 : index
    %c0_12 = arith.constant 0 : index
    %15 = vector.load %arg7[%c0_11, %c0_12] : memref<8x128xf32, #tpu.memory_space<vmem>>, vector<8x128xf32>
    tpu.vector_store %arg7[%c0_11, %c0_12], %14 {strides = array<i32>} : memref<8x128xf32, #tpu.memory_space<vmem>>, vector<8x128xf32>,
    %16 = tpu.iota {dimensions = array<i32: 1>} : vector<8x128xi32>
    %c4_i32 = arith.constant 4 : i32
    %17 = vector.broadcast %c4_i32 : i32 to vector<8x128xi32>
    %18 = arith.cmpi slt, %16, %17 : vector<8x128xi32>
    %cst_13 = arith.constant 0xFF800000 : f32
    %19 = vector.broadcast %cst_13 : f32 to vector<8x128xf32>
    %20 = arith.select %18, %14, %19 : vector<8x128xi1>, vector<8x128xf32>
    %cst_14 = arith.constant dense<0xFF800000> : vector<8xf32>
    %21 = vector.multi_reduction <maximumf>, %20, %cst_14 [1] : vector<8x128xf32> to vector<8xf32>
    %22 = vector.shape_cast %21 : vector<8xf32> to vector<8x1xf32>
    %23 = vector.broadcast %22 : vector<8x1xf32> to vector<8x128xf32>
    %24 = arith.subf %20, %23 : vector<8x128xf32>
    %25 = math.exp %24 : vector<8x128xf32>
    %cst_15 = arith.constant dense<0.000000e+00> : vector<8xf32>
    %26 = vector.multi_reduction <add>, %25, %cst_15 [1] : vector<8x128xf32> to vector<8xf32>
    %27 = vector.shape_cast %26 : vector<8xf32> to vector<8x1xf32>
    %28 = math.log %27 : vector<8x1xf32>
    %29 = arith.addf %22, %28 : vector<8x1xf32>
    %c0_16 = arith.constant 0 : index
    %c0_17 = arith.constant 0 : index
    %30 = vector.load %arg2[%c0_16, %c0_17] : memref<8x1xi32, #tpu.memory_space<vmem>>, vector<8x1xi32>
    %31 = vector.broadcast %30 : vector<8x1xi32> to vector<8x128xi32>
    %32 = arith.cmpi eq, %16, %31 : vector<8x128xi32>
    %33 = arith.extui %32 : vector<8x128xi1> to vector<8x128xi32>
    %34 = arith.sitofp %33 : vector<8x128xi32> to vector<8x128xf32>
    %35 = arith.mulf %14, %34 : vector<8x128xf32>
    %cst_18 = arith.constant dense<0.000000e+00> : vector<8xf32>
    %36 = vector.multi_reduction <add>, %35, %cst_18 [1] : vector<8x128xf32> to vector<8xf32>
    %37 = vector.shape_cast %36 : vector<8xf32> to vector<8x1xf32>
    %38 = arith.subf %29, %37 : vector<8x1xf32>
    %c0_19 = arith.constant 0 : index
    %c0_20 = arith.constant 0 : index
    %39 = vector.load %arg8[%c0_19, %c0_20] : memref<8x1xf32, #tpu.memory_space<vmem>>, vector<8x1xf32>
    tpu.vector_store %arg8[%c0_19, %c0_20], %38 {strides = array<i32>} : memref<8x1xf32, #tpu.memory_space<vmem>>, vector<8x1xf32>,
    return
  }
  func.func @transform_0(%arg0: i32) -> (i32, i32) {
    %c0_i32 = arith.constant 0 : i32
    %c0_i32_0 = arith.constant 0 : i32
    return %arg0, %c0_i32 : i32, i32
  }
  func.func @transform_1(%arg0: i32) -> (i32, i32) {
    %c0_i32 = arith.constant 0 : i32
    %c0_i32_0 = arith.constant 0 : i32
    return %arg0, %c0_i32 : i32, i32
  }
  func.func @transform_2(%arg0: i32) -> (i32, i32) {
    %c0_i32 = arith.constant 0 : i32
    %c0_i32_0 = arith.constant 0 : i32
    %c0_i32_1 = arith.constant 0 : i32
    return %c0_i32, %c0_i32_0 : i32, i32
  }
  func.func @transform_3(%arg0: i32) -> (i32, i32) {
    %c0_i32 = arith.constant 0 : i32
    %c0_i32_0 = arith.constant 0 : i32
    %c0_i32_1 = arith.constant 0 : i32
    return %c0_i32, %c0_i32_0 : i32, i32
  }
  func.func @transform_4(%arg0: i32) -> (i32, i32) {
    %c0_i32 = arith.constant 0 : i32
    %c0_i32_0 = arith.constant 0 : i32
    %c0_i32_1 = arith.constant 0 : i32
    return %c0_i32, %c0_i32_0 : i32, i32
  }
  func.func @transform_5(%arg0: i32) -> (i32, i32) {
    %c0_i32 = arith.constant 0 : i32
    %c0_i32_0 = arith.constant 0 : i32
    %c0_i32_1 = arith.constant 0 : i32
    return %c0_i32, %c0_i32_0 : i32, i32
  }
  func.func @transform_6(%arg0: i32) -> (i32, i32) {
    %c0_i32 = arith.constant 0 : i32
    %c0_i32_0 = arith.constant 0 : i32
    return %arg0, %c0_i32 : i32, i32
  }
  func.func @transform_7(%arg0: i32) -> (i32, i32) {
    %c0_i32 = arith.constant 0 : i32
    %c0_i32_0 = arith.constant 0 : i32
    return %arg0, %c0_i32 : i32, i32
  }
}

</mosaic_0001>

<llo_original>
// kernel: _forward_with_loss.1
$region0: #{_forward_with_loss.1}
  #allocation0 [shape = 'u32[]', space=smem, size = 0x4, offset = 0x4, fixed_abs, tag = 'smem constant byte address 0x4 - core index']
  #allocation1 [shape = 'u32[72,128]{1,0:T(1,128)}', space=vmem, size = 0x9000, scoped, tag = 'internal scratch']
  %s0 = inlined_call_operand.vmem [shape: f32[10,32], index: 0, kind: input, shape index: {}]
  %s1 = inlined_call_operand.vmem [shape: s32[10,1], index: 1, kind: input, shape index: {}]
  %s2 = inlined_call_operand.hbm [shape: bf16[32,512], index: 2, kind: input, shape index: {}]
  %s3 = inlined_call_operand.vmem [shape: f32[1,512], index: 3, kind: input, shape index: {}]
  %s4 = inlined_call_operand.hbm [shape: bf16[512,128], index: 4, kind: input, shape index: {}]
  %s5 = inlined_call_operand.vmem [shape: f32[1,128], index: 5, kind: input, shape index: {}]
  %s6 = inlined_call_operand.hbm [shape: f32[10,128], index: 6, kind: output, shape index: {0}]
  %s7 = inlined_call_operand.vmem [shape: f32[10,1], index: 7, kind: output, shape index: {1}]
  %8 = xla_tuple %s6, %s7
  %s9 = sld [smem:[#allocation0]]
  $region73: #{_forward_with_loss.1} parent=0
    _
  %s11 = ssub.s32 1, %s9
  %s12 = scalar_select 0, %s11, %s9
  $region1: #{_forward_with_loss.1} parent=0
    #allocation2 [shape = 'u8[32768]{0}', space=vmem, size = 0x8000, scoped, tag = 'input window, operand 2, single buffered']
    #allocation3 [shape = 's32[2]{0}', space=sflag, size = 0x8, scoped, tag = 'scoped memory for _forward_with_loss.1']
    #allocation4 [shape = 's32[2]{0}', space=sflag, size = 0x8, scoped, tag = 'scoped memory for _forward_with_loss.1']
    #allocation5 [shape = 'u8[131072]{0}', space=vmem, size = 0x20000, scoped, tag = 'input window, operand 4, single buffered']
    #allocation6 [shape = 's32[1]{0}', space=sflag, size = 0x4, scoped, tag = 'scoped memory for _forward_with_loss.1']
    #allocation7 [shape = 'u8[8192]{0}', space=vmem, size = 0x2000, scoped, tag = 'output window, operand 0']
    %13 = vsyncpa [#allocation3], 0
    %14 = vsyncpa [#allocation6], 0
    %15 = vsyncpa [#allocation4], 0
    %s16 = scalar_lea.sflag [#allocation4], 1
    %17 = vsyncpa %s16, 0
    loop: start=0, step=1, limit=4
    $region2: #{_forward_with_loss.1} parent=1 // loop_pre_header
      _
    $region3: #{_forward_with_loss.1} parent=1 // loop_header
      %s19 = sphi 0, %s23
      %p20 = scmp.ge.s32.totalorder %s19, 4
      %s29 = sphi 0, %s31
      %s32 = sphi 0, %s29
      %s33 = sphi 0, %s32
      %s49 = sphi 0, %s33
      %s55 = sphi 0, %s57
      %s58 = sphi 0, %s55
      %s59 = sphi 0, %s58
      %s75 = sphi 0, %s59
      %s79 = sphi 0, %s79
      %s81 = sphi 0, %s79
      %s82 = sphi 0, %s81
      %s96 = sphi 0, %s82
      %s100 = sphi 0, %s100
      %s102 = sphi 0, %s100
      %s103 = sphi 0, %s102
      %s117 = sphi 0, %s103
      %s121 = sphi 0, %s121
      %s123 = sphi 0, %s121
      %s124 = sphi 0, %s123
      %s138 = sphi 0, %s124
      %s142 = sphi 0, %s142
      %s144 = sphi 0, %s142
      %s145 = sphi 0, %s144
      %s159 = sphi 0, %s145
      %s165 = sphi 0, %s167
      %s168 = sphi 0, %s165
      %s169 = sphi 0, %s168
      %s185 = sphi 0, %s169
      %s191 = sphi 0, %s193
      %s194 = sphi 0, %s191
      %s195 = sphi 0, %s194
      %s211 = sphi 0, %s195
    $region4: #{_forward_with_loss.1} parent=1 // loop_header_branch
      %22 = sbr.rel (%p20) target = $region8
    $region5: #{_forward_with_loss.1} parent=1 // loop_body
      %s24 = ssub.s32 %s19, 1
      %s25 = ssub.s32 %s19, 2
      %s26 = sadd.s32 %s19, 1
      %s27 = ssub.s32 %s19, %s26
      %p28 = scmp.eq.s32.totalorder %s27, 0
      %s30 = sadd.s32 %s29, 1
      %s31 = scalar_select %p28, %s29, %s30
      %p34 = pneg %p28
      %p35 = scmp.eq.s32.totalorder %s19, 1
      %p36 = por %p34, %p35
      %p37 = scmp.ne.s32.totalorder %s29, %s32
      %p38 = scmp.eq.s32.totalorder %s19, 0
      %p39 = por %p37, %p38
      %p40 = scmp.ne.s32.totalorder %s29, %s32
      %p41 = scmp.eq.s32.totalorder %s24, 1
      %p42 = por %p40, %p41
      %p43 = scmp.ne.s32.totalorder %s32, %s33
      %p44 = scmp.eq.s32.totalorder %s24, 0
      %p45 = por %p43, %p44
      %p46 = scmp.ne.s32.totalorder %s32, %s33
      %p47 = scmp.eq.s32.totalorder %s25, 1
      %p48 = por %p46, %p47
      %p50 = scmp.ne.s32.totalorder %s33, %s49
      %p51 = scmp.eq.s32.totalorder %s25, 0
      %p52 = por %p50, %p51
      %s53 = ssub.s32 %s19, %s26
      %p54 = scmp.eq.s32.totalorder %s53, 0
      %s56 = sadd.s32 %s55, 1
      %s57 = scalar_select %p54, %s55, %s56
      %p60 = pneg %p54
      %p61 = scmp.eq.s32.totalorder %s19, 1
      %p62 = por %p60, %p61
      %p63 = scmp.ne.s32.totalorder %s55, %s58
      %p64 = scmp.eq.s32.totalorder %s19, 0
      %p65 = por %p63, %p64
      %p66 = scmp.ne.s32.totalorder %s55, %s58
      %p67 = scmp.eq.s32.totalorder %s24, 1
      %p68 = por %p66, %p67
      %p69 = scmp.ne.s32.totalorder %s58, %s59
      %p70 = scmp.eq.s32.totalorder %s24, 0
      %p71 = por %p69, %p70
      %p72 = scmp.ne.s32.totalorder %s58, %s59
      %p73 = scmp.eq.s32.totalorder %s25, 1
      %p74 = por %p72, %p73
      %p76 = scmp.ne.s32.totalorder %s59, %s75
      %p77 = scmp.eq.s32.totalorder %s25, 0
      %p78 = por %p76, %p77
      %s80 = sadd.s32 %s79, 1
      %p83 = scmp.eq.s32.totalorder %s19, 1
      %p84 = scmp.ne.s32.totalorder %s79, %s81
      %p85 = scmp.eq.s32.totalorder %s19, 0
      %p86 = por %p84, %p85
      %p87 = scmp.ne.s32.totalorder %s79, %s81
      %p88 = scmp.eq.s32.totalorder %s24, 1
      %p89 = por %p87, %p88
      %p90 = scmp.ne.s32.totalorder %s81, %s82
      %p91 = scmp.eq.s32.totalorder %s24, 0
      %p92 = por %p90, %p91
      %p93 = scmp.ne.s32.totalorder %s81, %s82
      %p94 = scmp.eq.s32.totalorder %s25, 1
      %p95 = por %p93, %p94
      %p97 = scmp.ne.s32.totalorder %s82, %s96
      %p98 = scmp.eq.s32.totalorder %s25, 0
      %p99 = por %p97, %p98
      %s101 = sadd.s32 %s100, 1
      %p104 = scmp.eq.s32.totalorder %s19, 1
      %p105 = scmp.ne.s32.totalorder %s100, %s102
      %p106 = scmp.eq.s32.totalorder %s19, 0
      %p107 = por %p105, %p106
      %p108 = scmp.ne.s32.totalorder %s100, %s102
      %p109 = scmp.eq.s32.totalorder %s24, 1
      %p110 = por %p108, %p109
      %p111 = scmp.ne.s32.totalorder %s102, %s103
      %p112 = scmp.eq.s32.totalorder %s24, 0
      %p113 = por %p111, %p112
      %p114 = scmp.ne.s32.totalorder %s102, %s103
      %p115 = scmp.eq.s32.totalorder %s25, 1
      %p116 = por %p114, %p115
      %p118 = scmp.ne.s32.totalorder %s103, %s117
      %p119 = scmp.eq.s32.totalorder %s25, 0
      %p120 = por %p118, %p119
      %s122 = sadd.s32 %s121, 1
      %p125 = scmp.eq.s32.totalorder %s19, 1
      %p126 = scmp.ne.s32.totalorder %s121, %s123
      %p127 = scmp.eq.s32.totalorder %s19, 0
      %p128 = por %p126, %p127
      %p129 = scmp.ne.s32.totalorder %s121, %s123
      %p130 = scmp.eq.s32.totalorder %s24, 1
      %p131 = por %p129, %p130
      %p132 = scmp.ne.s32.totalorder %s123, %s124
      %p133 = scmp.eq.s32.totalorder %s24, 0
      %p134 = por %p132, %p133
      %p135 = scmp.ne.s32.totalorder %s123, %s124
      %p136 = scmp.eq.s32.totalorder %s25, 1
      %p137 = por %p135, %p136
      %p139 = scmp.ne.s32.totalorder %s124, %s138
      %p140 = scmp.eq.s32.totalorder %s25, 0
      %p141 = por %p139, %p140
      %s143 = sadd.s32 %s142, 1
      %p146 = scmp.eq.s32.totalorder %s19, 1
      %p147 = scmp.ne.s32.totalorder %s142, %s144
      %p148 = scmp.eq.s32.totalorder %s19, 0
      %p149 = por %p147, %p148
      %p150 = scmp.ne.s32.totalorder %s142, %s144
      %p151 = scmp.eq.s32.totalorder %s24, 1
      %p152 = por %p150, %p151
      %p153 = scmp.ne.s32.totalorder %s144, %s145
      %p154 = scmp.eq.s32.totalorder %s24, 0
      %p155 = por %p153, %p154
      %p156 = scmp.ne.s32.totalorder %s144, %s145
      %p157 = scmp.eq.s32.totalorder %s25, 1
      %p158 = por %p156, %p157
      %p160 = scmp.ne.s32.totalorder %s145, %s159
      %p161 = scmp.eq.s32.totalorder %s25, 0
      %p162 = por %p160, %p161
      %s163 = ssub.s32 %s19, %s26
      %p164 = scmp.eq.s32.totalorder %s163, 0
      %s166 = sadd.s32 %s165, 1
      %s167 = scalar_select %p164, %s165, %s166
      %p170 = pneg %p164
      %p171 = scmp.eq.s32.totalorder %s19, 1
      %p172 = por %p170, %p171
      %p173 = scmp.ne.s32.totalorder %s165, %s168
      %p174 = scmp.eq.s32.totalorder %s19, 0
      %p175 = por %p173, %p174
      %p176 = scmp.ne.s32.totalorder %s165, %s168
      %p177 = scmp.eq.s32.totalorder %s24, 1
      %p178 = por %p176, %p177
      %p179 = scmp.ne.s32.totalorder %s168, %s169
      %p180 = scmp.eq.s32.totalorder %s24, 0
      %p181 = por %p179, %p180
      %p182 = scmp.ne.s32.totalorder %s168, %s169
      %p183 = scmp.eq.s32.totalorder %s25, 1
      %p184 = por %p182, %p183
      %p186 = scmp.ne.s32.totalorder %s169, %s185
      %p187 = scmp.eq.s32.totalorder %s25, 0
      %p188 = por %p186, %p187
      %s189 = ssub.s32 %s19, %s26
      %p190 = scmp.eq.s32.totalorder %s189, 0
      %s192 = sadd.s32 %s191, 1
      %s193 = scalar_select %p190, %s191, %s192
      %p196 = pneg %p190
      %p197 = scmp.eq.s32.totalorder %s19, 1
      %p198 = por %p196, %p197
      %p199 = scmp.ne.s32.totalorder %s191, %s194
      %p200 = scmp.eq.s32.totalorder %s19, 0
      %p201 = por %p199, %p200
      %p202 = scmp.ne.s32.totalorder %s191, %s194
      %p203 = scmp.eq.s32.totalorder %s24, 1
      %p204 = por %p202, %p203
      %p205 = scmp.ne.s32.totalorder %s194, %s195
      %p206 = scmp.eq.s32.totalorder %s24, 0
      %p207 = por %p205, %p206
      %p208 = scmp.ne.s32.totalorder %s194, %s195
      %p209 = scmp.eq.s32.totalorder %s25, 1
      %p210 = por %p208, %p209
      %p212 = scmp.ne.s32.totalorder %s195, %s211
      %p213 = scmp.eq.s32.totalorder %s25, 0
      %p214 = por %p212, %p213
      %p215 = scmp.le.s32.totalorder 1, %s19
      %p216 = scmp.lt.s32.totalorder %s19, 3
      %p217 = pnand %p215, %p216
      %p218 = pneg %p217
      // Predicated region
      $region9: #{_forward_with_loss.1} parent=5 // pred_check
        _
      $region10: #{_forward_with_loss.1} parent=5 // pred_check_branch
        %220 = sbr.rel (%p217) target = $region12
      $region11: #{_forward_with_loss.1} parent=5 // pred_region
        %s221 = ssub.s32 %s19, 1
        // Predicated region
        $region13: #{_forward_with_loss.1} parent=11 // pred_check
          %p222 = pneg %p92
        $region14: #{_forward_with_loss.1} parent=11 // pred_check_branch
          %224 = sbr.rel (%p222) target = $region16
        $region15: #{_forward_with_loss.1} parent=11 // pred_region
          %226 = vsyncadd [#allocation3], 0
          %s227 = sshll.u32 %s2, 4
          %s228 = int_to_ptr.hbm [resolvable:$true] %s227
          %s229 = sshll.u32 [#allocation2], 4
          %s230 = int_to_ptr.vmem [resolvable:$true] %s229
          %235 = dma.hbm_to_vmem [thread:$0]  %s228, 1024, %s230, [#allocation3], 256, 256, 16
        $region16: #{_forward_with_loss.1} parent=11 // pred_fallthru
          _
        // Predicated region
        $region17: #{_forward_with_loss.1} parent=11 // pred_check
          %p236 = pneg %p113
        $region18: #{_forward_with_loss.1} parent=11 // pred_check_branch
          %238 = sbr.rel (%p236) target = $region20
        $region19: #{_forward_with_loss.1} parent=11 // pred_region
          _
        $region20: #{_forward_with_loss.1} parent=11 // pred_fallthru
          _
        // Predicated region
        $region21: #{_forward_with_loss.1} parent=11 // pred_check
          %p239 = pneg %p134
        $region22: #{_forward_with_loss.1} parent=11 // pred_check_branch
          %241 = sbr.rel (%p239) target = $region24
        $region23: #{_forward_with_loss.1} parent=11 // pred_region
          %243 = vsyncadd [#allocation6], 0
          %s244 = sshll.u32 %s4, 4
          %s245 = int_to_ptr.hbm [resolvable:$true] %s244
          %s246 = sshll.u32 [#allocation5], 4
          %s247 = int_to_ptr.vmem [resolvable:$true] %s246
          %252 = dma.hbm_to_vmem [thread:$0]  %s245, 4096, %s247, [#allocation6], 64, 64, 4
        $region24: #{_forward_with_loss.1} parent=11 // pred_fallthru
          _
        // Predicated region
        $region25: #{_forward_with_loss.1} parent=11 // pred_check
          %p253 = pneg %p155
        $region26: #{_forward_with_loss.1} parent=11 // pred_check_branch
          %255 = sbr.rel (%p253) target = $region28
        $region27: #{_forward_with_loss.1} parent=11 // pred_region
          _
        $region28: #{_forward_with_loss.1} parent=11 // pred_fallthru
          _
      $region12: #{_forward_with_loss.1} parent=5 // pred_fallthru
        _
      %p256 = scmp.lt.s32.totalorder %s19, 2
      // Predicated region
      $region29: #{_forward_with_loss.1} parent=5 // pred_check
        %p257 = pneg %p256
      $region30: #{_forward_with_loss.1} parent=5 // pred_check_branch
        %259 = sbr.rel (%p257) target = $region32
      $region31: #{_forward_with_loss.1} parent=5 // pred_region
        // Predicated region
        $region33: #{_forward_with_loss.1} parent=31 // pred_check
          %p260 = pneg %p39
        $region34: #{_forward_with_loss.1} parent=31 // pred_check_branch
          %262 = sbr.rel (%p260) target = $region36
        $region35: #{_forward_with_loss.1} parent=31 // pred_region
          %p263 = scmp.lt.s32.totalorder %s19, 1
          %s264 = scalar_select %p263, %s19, 1
          %s265 = smul.addr %s264, 8
          %s266 = scalar_lea.vmem %s0, %s265
        $region36: #{_forward_with_loss.1} parent=31 // pred_fallthru
          _
        // Predicated region
        $region37: #{_forward_with_loss.1} parent=31 // pred_check
          %p267 = pneg %p65
        $region38: #{_forward_with_loss.1} parent=31 // pred_check_branch
          %269 = sbr.rel (%p267) target = $region40
        $region39: #{_forward_with_loss.1} parent=31 // pred_region
          %p270 = scmp.lt.s32.totalorder %s19, 1
          %s271 = scalar_select %p270, %s19, 1
          %s272 = smul.addr %s271, 8
          %s273 = scalar_lea.vmem %s1, %s272
        $region40: #{_forward_with_loss.1} parent=31 // pred_fallthru
          _
      $region32: #{_forward_with_loss.1} parent=5 // pred_fallthru
        _
      %p274 = scmp.le.s32.totalorder 1, %s19
      %p275 = scmp.lt.s32.totalorder %s19, 3
      %p276 = pnand %p274, %p275
      %p277 = pneg %p276
      // Predicated region
      $region41: #{_forward_with_loss.1} parent=5 // pred_check
        _
      $region42: #{_forward_with_loss.1} parent=5 // pred_check_branch
        %279 = sbr.rel (%p276) target = $region44
      $region43: #{_forward_with_loss.1} parent=5 // pred_region
        %s280 = ssub.s32 %s19, 1
        // Predicated region
        $region45: #{_forward_with_loss.1} parent=43 // pred_check
          %p281 = pneg %p92
        $region46: #{_forward_with_loss.1} parent=43 // pred_check_branch
          %283 = sbr.rel (%p281) target = $region48
        $region47: #{_forward_with_loss.1} parent=43 // pred_region
          %285 = dma.done [#allocation3], 1024
        $region48: #{_forward_with_loss.1} parent=43 // pred_fallthru
          _
        // Predicated region
        $region49: #{_forward_with_loss.1} parent=43 // pred_check
          %p286 = pneg %p134
        $region50: #{_forward_with_loss.1} parent=43 // pred_check_branch
          %288 = sbr.rel (%p286) target = $region52
        $region51: #{_forward_with_loss.1} parent=43 // pred_region
          %290 = dma.done [#allocation6], 4096
        $region52: #{_forward_with_loss.1} parent=43 // pred_fallthru
          _
        %p291 = scmp.lt.s32.totalorder %s24, 1
        %s292 = scalar_select %p291, %s24, 1
        %s293 = smul.addr %s292, 8
        %s294 = scalar_lea.vmem %s0, %s293
        %p295 = pneg %p45
        %p296 = pneg %p42
        %p297 = scmp.lt.s32.totalorder %s24, 1
        %s298 = scalar_select %p297, %s24, 1
        %s299 = smul.addr %s298, 8
        %s300 = scalar_lea.vmem %s1, %s299
        %p301 = pneg %p71
        %p302 = pneg %p68
        %p303 = pneg %p92
        %p304 = pneg %p89
        %p305 = pneg %p113
        %p306 = pneg %p110
        %p307 = pneg %p134
        %p308 = pneg %p131
        %p309 = pneg %p155
        %p310 = pneg %p152
        %p311 = pneg %p181
        %p312 = pneg %p178
        %s313 = sand.u32 %s168, 1
        %s314 = scalar_lea.sflag [#allocation4], %s313
        %s315 = sand.u32 %s168, 1
        %s316 = smul.addr %s315, 8
        %s317 = scalar_lea.vmem [#allocation7], %s316
        %p318 = pneg %p207
        %p319 = pneg %p204
        %p320 = scmp.lt.s32.totalorder %s24, 1
        %s321 = scalar_select %p320, %s24, 1
        %s322 = smul.addr %s321, 8
        %s323 = scalar_lea.vmem %s7, %s322
        %p324 = scmp.lt.s32.totalorder %s24, 1
        %s325 = scalar_select %p324, %s24, 1
        %s326 = smul.addr %s325, 8
        %s327 = scalar_lea.vmem %s0, %s326
        %p328 = scmp.lt.s32.totalorder %s24, 1
        %s329 = scalar_select %p328, %s24, 1
        %s330 = smul.addr %s329, 8
        %s331 = scalar_lea.vmem %s1, %s330
        %p332 = scmp.lt.s32.totalorder %s24, 1
        %s333 = scalar_select %p332, %s24, 1
        %s334 = smul.addr %s333, 8
        %s335 = scalar_lea.vmem %s7, %s334
        %v337 = vld [vmem:[%s327] sm:$0xff]
        %v338 = vpack.c.bf16 %v337, %v337
        %v339 = vld [vmem:[#allocation2] sm:$0xff]
        %v340 = vld [vmem:[#allocation2 + $0x8] sm:$0xff]
        %v341 = vld [vmem:[#allocation2 + $0x10] sm:$0xff]
        %v342 = vld [vmem:[#allocation2 + $0x18] sm:$0xff]
        %v343 = vld [vmem:[#allocation2 + $0x20] sm:$0xff]
        %v344 = vld [vmem:[#allocation2 + $0x28] sm:$0xff]
        %v345 = vld [vmem:[#allocation2 + $0x30] sm:$0xff]
        %v346 = vld [vmem:[#allocation2 + $0x38] sm:$0xff]
        %v347 = vld [vmem:[%s3] sm:$0xf]
        %v349 = vperm.slane %v347, 0
        %v350 = vperm.slane %v347, 1
        %v351 = vperm.slane %v347, 2
        %v352 = vperm.slane %v347, 3
        %v365 = vunpack.c.l.b16 %v339
        %v366 = vunpack.c.h.b16 %v339
        %v367 = vunpack.c.l.b16 %v340
        %v368 = vunpack.c.h.b16 %v340
        %v369 = vunpack.c.l.b16 %v341
        %v370 = vunpack.c.h.b16 %v341
        %v371 = vunpack.c.l.b16 %v342
        %v372 = vunpack.c.h.b16 %v342
        %v373 = vunpack.c.l.b16 %v343
        %v374 = vunpack.c.h.b16 %v343
        %v375 = vunpack.c.l.b16 %v344
        %v376 = vunpack.c.h.b16 %v344
        %v377 = vunpack.c.l.b16 %v345
        %v378 = vunpack.c.h.b16 %v345
        %v379 = vunpack.c.l.b16 %v346
        %v380 = vunpack.c.h.b16 %v346
        %v381 = vpack.c.b16 %v369, %v365
        %v382 = vpack.c.b16 %v370, %v366
        %v383 = vpack.c.b16 %v371, %v367
        %v384 = vpack.c.b16 %v372, %v368
        %v385 = vpack.c.b16 %v377, %v373
        %v386 = vpack.c.b16 %v378, %v374
        %v387 = vpack.c.b16 %v379, %v375
        %v388 = vpack.c.b16 %v380, %v376
        %vm397 = vcmask 261120
        %v399 = vsel %vm397, %v338, 0
        %401 = vmatpush.bf16.msra.mxu0 0
        %402 = vmatpush.bf16.msra.mxu0 0
        %403 = vmatpush.bf16.msra.mxu0 0
        %404 = vmatpush.bf16.msra.mxu0 0
        %405 = vmatpush.bf16.msra.mxu0 0
        %406 = vmatpush.bf16.msra.mxu0 0
        %407 = vmatpush.bf16.msra.mxu0 %v385
        %408 = vmatpush.bf16.msra.mxu0 %v381
        %409 = vmatmul.bf16.gmra.mxu0 %v399
        %v410 = vpop.f32.mrf.mxu0
        %v411 = vadd.f32 %v349, %v410
        %v412 = vpop.f32.mrf.mxu0
        %413 = vdwg.mxu0
        %414 = vmatpush.bf16.msra.mxu0 0
        %415 = vmatpush.bf16.msra.mxu0 0
        %416 = vmatpush.bf16.msra.mxu0 0
        %417 = vmatpush.bf16.msra.mxu0 0
        %418 = vmatpush.bf16.msra.mxu0 0
        %419 = vmatpush.bf16.msra.mxu0 0
        %420 = vmatpush.bf16.msra.mxu0 %v386
        %421 = vmatpush.bf16.msra.mxu0 %v382
        %422 = vmatmul.bf16.gmra.mxu0 %v399
        %v423 = vpop.f32.mrf.mxu0
        %v424 = vadd.f32 %v350, %v423
        %v425 = vpop.f32.mrf.mxu0
        %426 = vdwg.mxu0
        %427 = vmatpush.bf16.msra.mxu0 0
        %428 = vmatpush.bf16.msra.mxu0 0
        %429 = vmatpush.bf16.msra.mxu0 0
        %430 = vmatpush.bf16.msra.mxu0 0
        %431 = vmatpush.bf16.msra.mxu0 0
        %432 = vmatpush.bf16.msra.mxu0 0
        %433 = vmatpush.bf16.msra.mxu0 %v387
        %434 = vmatpush.bf16.msra.mxu0 %v383
        %435 = vmatmul.bf16.gmra.mxu0 %v399
        %v436 = vpop.f32.mrf.mxu0
        %v437 = vadd.f32 %v351, %v436
        %v438 = vpop.f32.mrf.mxu0
        %439 = vdwg.mxu0
        %440 = vmatpush.bf16.msra.mxu0 0
        %441 = vmatpush.bf16.msra.mxu0 0
        %442 = vmatpush.bf16.msra.mxu0 0
        %443 = vmatpush.bf16.msra.mxu0 0
        %444 = vmatpush.bf16.msra.mxu0 0
        %445 = vmatpush.bf16.msra.mxu0 0
        %446 = vmatpush.bf16.msra.mxu0 %v388
        %447 = vmatpush.bf16.msra.mxu0 %v384
        %448 = vmatmul.bf16.gmra.mxu0 %v399
        %v449 = vpop.f32.mrf.mxu0
        %v450 = vadd.f32 %v352, %v449
        %v451 = vpop.f32.mrf.mxu0
        %452 = vdwg.mxu0
        %v453 = vmax.f32 %v411, 0.0
        %v454 = vmax.f32 %v424, 0.0
        %v455 = vmax.f32 %v437, 0.0
        %v456 = vmax.f32 %v450, 0.0
        %v457 = vpack.c.bf16 %v453, %v453
        %v458 = vpack.c.bf16 %v454, %v454
        %v459 = vpack.c.bf16 %v455, %v455
        %v460 = vpack.c.bf16 %v456, %v456
        %v461 = vld [vmem:[#allocation5] sm:$0xf]
        %v462 = vld [vmem:[#allocation5 + $0x4] sm:$0xf]
        %v463 = vld [vmem:[#allocation5 + $0x8] sm:$0xf]
        %v464 = vld [vmem:[#allocation5 + $0xc] sm:$0xf]
        %v465 = vld [vmem:[#allocation5 + $0x10] sm:$0xf]
        %v466 = vld [vmem:[#allocation5 + $0x14] sm:$0xf]
        %v467 = vld [vmem:[#allocation5 + $0x18] sm:$0xf]
        %v468 = vld [vmem:[#allocation5 + $0x1c] sm:$0xf]
        %v469 = vld [vmem:[#allocation5 + $0x20] sm:$0xf]
        %v470 = vld [vmem:[#allocation5 + $0x24] sm:$0xf]
        %v471 = vld [vmem:[#allocation5 + $0x28] sm:$0xf]
        %v472 = vld [vmem:[#allocation5 + $0x2c] sm:$0xf]
        %v473 = vld [vmem:[#allocation5 + $0x30] sm:$0xf]
        %v474 = vld [vmem:[#allocation5 + $0x34] sm:$0xf]
        %v475 = vld [vmem:[#allocation5 + $0x38] sm:$0xf]
        %v476 = vld [vmem:[#allocation5 + $0x3c] sm:$0xf]
        %v477 = vld [vmem:[#allocation5 + $0x40] sm:$0xf]
        %v478 = vld [vmem:[#allocation5 + $0x44] sm:$0xf]
        %v479 = vld [vmem:[#allocation5 + $0x48] sm:$0xf]
        %v480 = vld [vmem:[#allocation5 + $0x4c] sm:$0xf]
        %v481 = vld [vmem:[#allocation5 + $0x50] sm:$0xf]
        %v482 = vld [vmem:[#allocation5 + $0x54] sm:$0xf]
        %v483 = vld [vmem:[#allocation5 + $0x58] sm:$0xf]
        %v484 = vld [vmem:[#allocation5 + $0x5c] sm:$0xf]
        %v485 = vld [vmem:[#allocation5 + $0x60] sm:$0xf]
        %v486 = vld [vmem:[#allocation5 + $0x64] sm:$0xf]
        %v487 = vld [vmem:[#allocation5 + $0x68] sm:$0xf]
        %v488 = vld [vmem:[#allocation5 + $0x6c] sm:$0xf]
        %v489 = vld [vmem:[#allocation5 + $0x70] sm:$0xf]
        %v490 = vld [vmem:[#allocation5 + $0x74] sm:$0xf]
        %v491 = vld [vmem:[#allocation5 + $0x78] sm:$0xf]
        %v492 = vld [vmem:[#allocation5 + $0x7c] sm:$0xf]
        %v493 = vld [vmem:[#allocation5 + $0x80] sm:$0xf]
        %v494 = vld [vmem:[#allocation5 + $0x84] sm:$0xf]
        %v495 = vld [vmem:[#allocation5 + $0x88] sm:$0xf]
        %v496 = vld [vmem:[#allocation5 + $0x8c] sm:$0xf]
        %v497 = vld [vmem:[#allocation5 + $0x90] sm:$0xf]
        %v498 = vld [vmem:[#allocation5 + $0x94] sm:$0xf]
        %v499 = vld [vmem:[#allocation5 + $0x98] sm:$0xf]
        %v500 = vld [vmem:[#allocation5 + $0x9c] sm:$0xf]
        %v501 = vld [vmem:[#allocation5 + $0xa0] sm:$0xf]
        %v502 = vld [vmem:[#allocation5 + $0xa4] sm:$0xf]
        %v503 = vld [vmem:[#allocation5 + $0xa8] sm:$0xf]
        %v504 = vld [vmem:[#allocation5 + $0xac] sm:$0xf]
        %v505 = vld [vmem:[#allocation5 + $0xb0] sm:$0xf]
        %v506 = vld [vmem:[#allocation5 + $0xb4] sm:$0xf]
        %v507 = vld [vmem:[#allocation5 + $0xb8] sm:$0xf]
        %v508 = vld [vmem:[#allocation5 + $0xbc] sm:$0xf]
        %v509 = vld [vmem:[#allocation5 + $0xc0] sm:$0xf]
        %v510 = vld [vmem:[#allocation5 + $0xc4] sm:$0xf]
        %v511 = vld [vmem:[#allocation5 + $0xc8] sm:$0xf]
        %v512 = vld [vmem:[#allocation5 + $0xcc] sm:$0xf]
        %v513 = vld [vmem:[#allocation5 + $0xd0] sm:$0xf]
        %v514 = vld [vmem:[#allocation5 + $0xd4] sm:$0xf]
        %v515 = vld [vmem:[#allocation5 + $0xd8] sm:$0xf]
        %v516 = vld [vmem:[#allocation5 + $0xdc] sm:$0xf]
        %v517 = vld [vmem:[#allocation5 + $0xe0] sm:$0xf]
        %v518 = vld [vmem:[#allocation5 + $0xe4] sm:$0xf]
        %v519 = vld [vmem:[#allocation5 + $0xe8] sm:$0xf]
        %v520 = vld [vmem:[#allocation5 + $0xec] sm:$0xf]
        %v521 = vld [vmem:[#allocation5 + $0xf0] sm:$0xf]
        %v522 = vld [vmem:[#allocation5 + $0xf4] sm:$0xf]
        %v523 = vld [vmem:[#allocation5 + $0xf8] sm:$0xf]
        %v524 = vld [vmem:[#allocation5 + $0xfc] sm:$0xf]
        %v525 = vld [vmem:[%s5] sm:$0x1]
        %v527 = vperm.slane %v525, 0
        %v593 = vunpack.c.l.b16 %v461
        %v594 = vunpack.c.l.b16 %v462
        %v595 = vunpack.c.l.b16 %v463
        %v596 = vunpack.c.l.b16 %v464
        %v597 = vunpack.c.l.b16 %v465
        %v598 = vunpack.c.l.b16 %v466
        %v599 = vunpack.c.l.b16 %v467
        %v600 = vunpack.c.l.b16 %v468
        %v601 = vunpack.c.l.b16 %v469
        %v602 = vunpack.c.l.b16 %v470
        %v603 = vunpack.c.l.b16 %v471
        %v604 = vunpack.c.l.b16 %v472
        %v605 = vunpack.c.l.b16 %v473
        %v606 = vunpack.c.l.b16 %v474
        %v607 = vunpack.c.l.b16 %v475
        %v608 = vunpack.c.l.b16 %v476
        %v609 = vunpack.c.l.b16 %v477
        %v610 = vunpack.c.l.b16 %v478
        %v611 = vunpack.c.l.b16 %v479
        %v612 = vunpack.c.l.b16 %v480
        %v613 = vunpack.c.l.b16 %v481
        %v614 = vunpack.c.l.b16 %v482
        %v615 = vunpack.c.l.b16 %v483
        %v616 = vunpack.c.l.b16 %v484
        %v617 = vunpack.c.l.b16 %v485
        %v618 = vunpack.c.l.b16 %v486
        %v619 = vunpack.c.l.b16 %v487
        %v620 = vunpack.c.l.b16 %v488
        %v621 = vunpack.c.l.b16 %v489
        %v622 = vunpack.c.l.b16 %v490
        %v623 = vunpack.c.l.b16 %v491
        %v624 = vunpack.c.l.b16 %v492
        %v625 = vunpack.c.l.b16 %v493
        %v626 = vunpack.c.l.b16 %v494
        %v627 = vunpack.c.l.b16 %v495
        %v628 = vunpack.c.l.b16 %v496
        %v629 = vunpack.c.l.b16 %v497
        %v630 = vunpack.c.l.b16 %v498
        %v631 = vunpack.c.l.b16 %v499
        %v632 = vunpack.c.l.b16 %v500
        %v633 = vunpack.c.l.b16 %v501
        %v634 = vunpack.c.l.b16 %v502
        %v635 = vunpack.c.l.b16 %v503
        %v636 = vunpack.c.l.b16 %v504
        %v637 = vunpack.c.l.b16 %v505
        %v638 = vunpack.c.l.b16 %v506
        %v639 = vunpack.c.l.b16 %v507
        %v640 = vunpack.c.l.b16 %v508
        %v641 = vunpack.c.l.b16 %v509
        %v642 = vunpack.c.l.b16 %v510
        %v643 = vunpack.c.l.b16 %v511
        %v644 = vunpack.c.l.b16 %v512
        %v645 = vunpack.c.l.b16 %v513
        %v646 = vunpack.c.l.b16 %v514
        %v647 = vunpack.c.l.b16 %v515
        %v648 = vunpack.c.l.b16 %v516
        %v649 = vunpack.c.l.b16 %v517
        %v650 = vunpack.c.l.b16 %v518
        %v651 = vunpack.c.l.b16 %v519
        %v652 = vunpack.c.l.b16 %v520
        %v653 = vunpack.c.l.b16 %v521
        %v654 = vunpack.c.l.b16 %v522
        %v655 = vunpack.c.l.b16 %v523
        %v656 = vunpack.c.l.b16 %v524
        %v657 = vpack.c.b16 %v594, %v593
        %v658 = vpack.c.b16 %v596, %v595
        %v659 = vpack.c.b16 %v598, %v597
        %v660 = vpack.c.b16 %v600, %v599
        %v661 = vpack.c.b16 %v602, %v601
        %v662 = vpack.c.b16 %v604, %v603
        %v663 = vpack.c.b16 %v606, %v605
        %v664 = vpack.c.b16 %v608, %v607
        %v665 = vpack.c.b16 %v610, %v609
        %v666 = vpack.c.b16 %v612, %v611
        %v667 = vpack.c.b16 %v614, %v613
        %v668 = vpack.c.b16 %v616, %v615
        %v669 = vpack.c.b16 %v618, %v617
        %v670 = vpack.c.b16 %v620, %v619
        %v671 = vpack.c.b16 %v622, %v621
        %v672 = vpack.c.b16 %v624, %v623
        %v673 = vpack.c.b16 %v626, %v625
        %v674 = vpack.c.b16 %v628, %v627
        %v675 = vpack.c.b16 %v630, %v629
        %v676 = vpack.c.b16 %v632, %v631
        %v677 = vpack.c.b16 %v634, %v633
        %v678 = vpack.c.b16 %v636, %v635
        %v679 = vpack.c.b16 %v638, %v637
        %v680 = vpack.c.b16 %v640, %v639
        %v681 = vpack.c.b16 %v642, %v641
        %v682 = vpack.c.b16 %v644, %v643
        %v683 = vpack.c.b16 %v646, %v645
        %v684 = vpack.c.b16 %v648, %v647
        %v685 = vpack.c.b16 %v650, %v649
        %v686 = vpack.c.b16 %v652, %v651
        %v687 = vpack.c.b16 %v654, %v653
        %v688 = vpack.c.b16 %v656, %v655
        %721 = vmatpush.bf16.msra.mxu0 %v664
        %722 = vmatpush.bf16.msra.mxu0 %v663
        %723 = vmatpush.bf16.msra.mxu0 %v662
        %724 = vmatpush.bf16.msra.mxu0 %v661
        %725 = vmatpush.bf16.msra.mxu0 %v660
        %726 = vmatpush.bf16.msra.mxu0 %v659
        %727 = vmatpush.bf16.msra.mxu0 %v658
        %728 = vmatpush.bf16.msra.mxu0 %v657
        %729 = vmatmul.bf16.gmra.mxu0 %v457
        %v730 = vpop.f32.mrf.mxu0
        %v731 = vadd.f32 %v527, %v730
        %v732 = vpop.f32.mrf.mxu0
        %733 = vdwg.mxu0
        %734 = vmatpush.bf16.msra.mxu0 %v672
        %735 = vmatpush.bf16.msra.mxu0 %v671
        %736 = vmatpush.bf16.msra.mxu0 %v670
        %737 = vmatpush.bf16.msra.mxu0 %v669
        %738 = vmatpush.bf16.msra.mxu0 %v668
        %739 = vmatpush.bf16.msra.mxu0 %v667
        %740 = vmatpush.bf16.msra.mxu0 %v666
        %741 = vmatpush.bf16.msra.mxu0 %v665
        %742 = vmatmul.bf16.gmra.mxu0 %v458
        %v743 = vpop.f32.mrf.mxu0
        %v744 = vadd.f32 %v731, %v743
        %v745 = vpop.f32.mrf.mxu0
        %746 = vdwg.mxu0
        %747 = vmatpush.bf16.msra.mxu0 %v680
        %748 = vmatpush.bf16.msra.mxu0 %v679
        %749 = vmatpush.bf16.msra.mxu0 %v678
        %750 = vmatpush.bf16.msra.mxu0 %v677
        %751 = vmatpush.bf16.msra.mxu0 %v676
        %752 = vmatpush.bf16.msra.mxu0 %v675
        %753 = vmatpush.bf16.msra.mxu0 %v674
        %754 = vmatpush.bf16.msra.mxu0 %v673
        %755 = vmatmul.bf16.gmra.mxu0 %v459
        %v756 = vpop.f32.mrf.mxu0
        %v757 = vadd.f32 %v744, %v756
        %v758 = vpop.f32.mrf.mxu0
        %759 = vdwg.mxu0
        %760 = vmatpush.bf16.msra.mxu0 %v688
        %761 = vmatpush.bf16.msra.mxu0 %v687
        %762 = vmatpush.bf16.msra.mxu0 %v686
        %763 = vmatpush.bf16.msra.mxu0 %v685
        %764 = vmatpush.bf16.msra.mxu0 %v684
        %765 = vmatpush.bf16.msra.mxu0 %v683
        %766 = vmatpush.bf16.msra.mxu0 %v682
        %767 = vmatpush.bf16.msra.mxu0 %v681
        %768 = vmatmul.bf16.gmra.mxu0 %v460
        %v769 = vpop.f32.mrf.mxu0
        %v770 = vadd.f32 %v757, %v769
        %v771 = vpop.f32.mrf.mxu0
        %772 = vdwg.mxu0
        %773 = vst [vmem:[%s317] sm:$0xff] %v770
        %v774 = vlaneseq
        %v775 = vand.u32 %v774, 127
        %vm776 = vcmp.lt.s32.totalorder %v775, 4
        %v777 = vsel %vm776, %v770, -inf
        %778 = vmax.xlane.f32.xlu0 %v777
        %v779 = vpop.xlane.xlu0 %778
        %v780 = vsub.f32 %v777, %v779
        %v781 = vmul.f32 %v780, 1.442695
        %v782 = vpow.pop %v781
        %783 = vadd.xlane.f32.xlu0 %v782
        %v784 = vpop.xlane.xlu0 %783
        %v785 = vlog2.pop %v784
        %v786 = vmul.f32 %v785, 0.6931472
        %v787 = vadd.f32 %v779, %v786
        %v788 = vld [vmem:[%s331] sm:$0xff]
        %789 = vset.pattern.permute.xlu0 0
        %790 = vperm.xlu0 %789, %v788
        %v791 = vpop.permute.xlu0 %790
        %vm792 = vcmp.eq.s32.totalorder %v775, %v791
        %v793 = vsel %vm792, 1, 0
        %v794 = vcvt.s32.f32 %v793
        %v795 = vmul.f32 %v770, %v794
        %796 = vadd.xlane.f32.xlu0 %v795
        %v797 = vpop.xlane.xlu0 %796
        %v798 = vsub.f32 %v787, %v797
        %vm799 = vcmask 7168
        %800 = vst.msk [vmem:[%s335] sm:$0xff] %vm799, %v798
        %s801 = sand.u32 %s168, 1
        %s802 = scalar_lea.sflag [#allocation4], %s801
        %s803 = sand.u32 %s168, 1
        %s804 = smul.addr %s803, 8
        %s805 = scalar_lea.vmem [#allocation7], %s804
        %p806 = scmp.lt.s32.totalorder %s24, 1
        %s807 = scalar_select %p806, %s24, 1
        %s808 = smul.addr %s807, 8
        %s809 = scalar_lea.vmem %s7, %s808
        // Predicated region
        $region53: #{_forward_with_loss.1} parent=43 // pred_check
          %p810 = pneg %p178
        $region54: #{_forward_with_loss.1} parent=43 // pred_check_branch
          %812 = sbr.rel (%p810) target = $region56
        $region55: #{_forward_with_loss.1} parent=43 // pred_region
          %814 = vsyncadd %s802, 0
          %s815 = smul.addr %s24, 8
          %s816 = scalar_lea.hbm %s6, %s815
          %s818 = sshll.u32 %s805, 4
          %s819 = int_to_ptr.vmem [resolvable:$true] %s818
          %s820 = sshll.u32 %s816, 4
          %s821 = int_to_ptr.hbm [resolvable:$true] %s820
          %823 = dma.vmem_to_hbm [thread:$0]  %s819, 128, %s821, %s802
        $region56: #{_forward_with_loss.1} parent=43 // pred_fallthru
          _
        // Predicated region
        $region57: #{_forward_with_loss.1} parent=43 // pred_check
          %p824 = pneg %p204
        $region58: #{_forward_with_loss.1} parent=43 // pred_check_branch
          %826 = sbr.rel (%p824) target = $region60
        $region59: #{_forward_with_loss.1} parent=43 // pred_region
          _
        $region60: #{_forward_with_loss.1} parent=43 // pred_fallthru
          _
      $region44: #{_forward_with_loss.1} parent=5 // pred_fallthru
        _
      %p827 = scmp.le.s32.totalorder 2, %s19
      // Predicated region
      $region61: #{_forward_with_loss.1} parent=5 // pred_check
        %p828 = pneg %p827
      $region62: #{_forward_with_loss.1} parent=5 // pred_check_branch
        %830 = sbr.rel (%p828) target = $region64
      $region63: #{_forward_with_loss.1} parent=5 // pred_region
        %s831 = ssub.s32 %s19, 2
        // Predicated region
        $region65: #{_forward_with_loss.1} parent=63 // pred_check
          %p832 = pneg %p184
        $region66: #{_forward_with_loss.1} parent=63 // pred_check_branch
          %834 = sbr.rel (%p832) target = $region68
        $region67: #{_forward_with_loss.1} parent=63 // pred_region
          %s835 = sand.u32 %s169, 1
          %s836 = scalar_lea.sflag [#allocation4], %s835
          %s837 = sand.u32 %s169, 1
          %s838 = smul.addr %s837, 8
          %s839 = scalar_lea.vmem [#allocation7], %s838
          %841 = dma.done %s836, 128
        $region68: #{_forward_with_loss.1} parent=63 // pred_fallthru
          _
        // Predicated region
        $region69: #{_forward_with_loss.1} parent=63 // pred_check
          %p842 = pneg %p210
        $region70: #{_forward_with_loss.1} parent=63 // pred_check_branch
          %844 = sbr.rel (%p842) target = $region72
        $region71: #{_forward_with_loss.1} parent=63 // pred_region
          %p845 = scmp.lt.s32.totalorder %s25, 1
          %s846 = scalar_select %p845, %s25, 1
          %s847 = smul.addr %s846, 8
          %s848 = scalar_lea.vmem %s7, %s847
        $region72: #{_forward_with_loss.1} parent=63 // pred_fallthru
          _
      $region64: #{_forward_with_loss.1} parent=5 // pred_fallthru
        _
    $region6: #{_forward_with_loss.1} parent=1 // loop_footer
      %s23 = sadd.s32 1, %s19
    $region7: #{_forward_with_loss.1} parent=1 // loop_footer_branch
      %18 = sbr.rel target = $region3
    $region8: #{_forward_with_loss.1} parent=1 // loop_exit
      _
    %849 = vsyncpa [#allocation3], 1
    %s850 = scalar_lea.sflag [#allocation3], 1
    %851 = vsyncpa %s850, 1
    %852 = vsyncpa [#allocation6], 1
    %853 = vsyncpa [#allocation4], 1
    %s854 = scalar_lea.sflag [#allocation4], 1
    %855 = vsyncpa %s854, 1

</llo_original>
